<compile_context>
chip_gen: v7x
topology: tpu7x:2x2x1
jax: 0.10.0
libtpu: 0.0.40
codegen_flags: <defaults>
</compile_context>

<pallas_src>
import functools
from typing import Iterable

import jax
import jax.numpy as jnp
from jax.experimental import pallas as pl
from jax.experimental.pallas import tpu as pltpu


# ---------------------------------------------------------------------------
# Helpers / tuning constants
# ---------------------------------------------------------------------------
_LANE = 128
_SUBLANE = 8

_RESIDENT_TABLE_CAP = 24 << 20   # f32 table fully VMEM-resident below this (v7x-safe)
_PER_STEP_BUDGET = 16 << 20      # onehot + double-buffered out/ids tiles + acc
_VMEM_HEADROOM = 2 << 20
_MAX_BLOCK_IDS = 2048            # review: 1024-2048 rows per grid step
_MIN_BLOCK_IDS = 8               # sublane-aligned minimum bucket


def _round_up(x: int, m: int) -> int:
    return ((x + m - 1) // m) * m


def _next_pow2(x: int) -> int:
    return 1 if x <= 1 else 1 << (x - 1).bit_length()


def _pick_vocab_block(v_pad: int) -> int:
    for vk in (512, 256, 128):
        if v_pad % vk == 0:
            return vk
    return v_pad  # unreachable: v_pad is always a multiple of 128


# ---------------------------------------------------------------------------
# Kernels
# ---------------------------------------------------------------------------
def _gather_resident_kernel(ids_ref, table_ref, out_ref):
    # ids_ref:   (TB, 1)          int32   (VMEM, pipelined)
    # table_ref: (V_pad, E_pad)   float32 (whole-array VMEM operand: one copy)
    # out_ref:   (TB, E_pad)      float32
    tb = out_ref.shape[0]
    v_pad = table_ref.shape[0]

    ids = ids_ref[...]                                          # (TB, 1)
    col = jax.lax.broadcasted_iota(jnp.int32, (tb, v_pad), 1)   # (TB, V_pad)
    onehot = (col == ids).astype(table_ref.dtype)               # (TB, V_pad)

    out_ref[...] = jnp.dot(
        onehot, table_ref[...], preferred_element_type=jnp.float32
    ).astype(out_ref.dtype)


def _gather_vocab_blocked_kernel(ids_ref, table_ref, out_ref, acc_ref):
    # Grid = (id_block i ["parallel"], vocab_block k ["arbitrary"]).
    # ids_ref:   (TB, 1)        int32
    # table_ref: (VK, E_pad)    float32 (streamed slice of the table)
    # out_ref:   (TB, E_pad)    float32 (same block across k -> resident)
    # acc_ref:   (TB, E_pad)    float32 VMEM scratch
    k = pl.program_id(1)
    tb = out_ref.shape[0]
    vk = table_ref.shape[0]

    @pl.when(k == 0)
    def _():
        acc_ref[...] = jnp.zeros_like(acc_ref)

    ids = ids_ref[...]                                               # (TB, 1)
    col = jax.lax.broadcasted_iota(jnp.int32, (tb, vk), 1) + k * vk  # (TB, VK)
    onehot = (col == ids).astype(table_ref.dtype)

    acc_ref[...] += jnp.dot(
        onehot, table_ref[...], preferred_element_type=jnp.float32)

    @pl.when(k == pl.num_programs(1) - 1)
    def _():
        out_ref[...] = acc_ref[...].astype(out_ref.dtype)


# ---------------------------------------------------------------------------
# pallas_call wrappers
# ---------------------------------------------------------------------------
@functools.partial(jax.jit, static_argnames=("block_ids", "vocab_block"))
def _embedding_gather_padded(table_padded: jnp.ndarray,
                             ids_padded: jnp.ndarray,
                             *, block_ids: int,
                             vocab_block) -> jnp.ndarray:
    """Gather rows of a padded table for padded ids.

    table_padded: [V_pad, E_pad] f32   (V_pad % 128 == 0, E_pad % 128 == 0)
    ids_padded:   [N_pad, 1]     int32 (N_pad % block_ids == 0)
    vocab_block:  None -> VMEM-resident table path; int VK -> vocab-blocked path.
    returns:      [N_pad, E_pad] f32
    """
    n_pad = ids_padded.shape[0]
    v_pad, e_pad = table_padded.shape
    tb = block_ids
    isz = table_padded.dtype.itemsize

    cost = pl.CostEstimate(
        flops=2 * n_pad * v_pad * e_pad,
        transcendentals=0,
        bytes_accessed=v_pad * e_pad * isz + n_pad * 4 + n_pad * e_pad * isz,
    )

    if vocab_block is None or vocab_block >= v_pad:
        # ----- small-vocab path: whole table resident in VMEM (single copy).
        vmem_bytes = (
            v_pad * e_pad * isz          # table (single buffer)
            + 2 * tb * e_pad * isz       # double-buffered output tiles
            + 2 * tb * _LANE * 4         # double-buffered ids tiles (lane-padded)
            + tb * v_pad * 4             # one-hot intermediate
            + _VMEM_HEADROOM)
        return pl.pallas_call(
            _gather_resident_kernel,
            out_shape=jax.ShapeDtypeStruct((n_pad, e_pad), table_padded.dtype),
            grid=(n_pad // tb,),
            in_specs=[
                pl.BlockSpec((tb, 1), lambda i: (i, 0)),
                # Whole table, brought into VMEM once (no double buffering).
                pl.BlockSpec(memory_space=pltpu.MemorySpace.VMEM),
            ],
            out_specs=pl.BlockSpec((tb, e_pad), lambda i: (i, 0)),
            compiler_params=pltpu.CompilerParams(
                dimension_semantics=("parallel",),
                vmem_limit_bytes=min(max(vmem_bytes, 32 << 20), 64 << 20),
            ),
            cost_estimate=cost,
        )(ids_padded, table_padded)

    # ----- large-vocab path: stream the table in (VK, E_pad) slices and
    # accumulate partial one-hot matmuls over the "arbitrary" vocab axis.
    vk = vocab_block
    vmem_bytes = (
        2 * vk * e_pad * isz             # double-buffered table slices
        + 2 * tb * e_pad * isz           # double-buffered output tiles
        + tb * e_pad * 4                 # f32 accumulator scratch
        + 2 * tb * _LANE * 4             # double-buffered ids tiles
        + tb * vk * 4                    # one-hot slice
        + _VMEM_HEADROOM)
    return pl.pallas_call(
        _gather_vocab_blocked_kernel,
        out_shape=jax.ShapeDtypeStruct((n_pad, e_pad), table_padded.dtype),
        grid=(n_pad // tb, v_pad // vk),
        in_specs=[
            pl.BlockSpec((tb, 1), lambda i, k: (i, 0)),
            pl.BlockSpec((vk, e_pad), lambda i, k: (k, 0)),
        ],
        out_specs=pl.BlockSpec((tb, e_pad), lambda i, k: (i, 0)),
        scratch_shapes=[pltpu.VMEM((tb, e_pad), jnp.float32)],
        compiler_params=pltpu.CompilerParams(
            dimension_semantics=("parallel", "arbitrary"),
            vmem_limit_bytes=min(max(vmem_bytes, 32 << 20), 64 << 20),
        ),
        cost_estimate=cost,
    )(ids_padded, table_padded)


def embedding_forwards_pallas(emb_table_padded: jnp.ndarray,
                              ids: jnp.ndarray,
                              n_valid: int,
                              emb_size: int,
                              padding_idx: int) -> jnp.ndarray:
    """Gather `emb_table[ids]` with the Pallas kernel; returns [n_valid, emb_size]."""
    v_pad, e_pad = emb_table_padded.shape
    isz = 4  # f32 table

    table_bytes = v_pad * e_pad * isz
    resident = table_bytes <= _RESIDENT_TABLE_CAP
    vocab_block = None if resident else _pick_vocab_block(v_pad)
    v_eff = v_pad if resident else vocab_block

    # Largest power-of-two id block whose per-step working set fits the budget.
    def per_step(t):
        return (t * v_eff * 4            # one-hot
                + 2 * t * e_pad * isz    # double-buffered output tiles
                + t * e_pad * 4          # accumulator (blocked path; cheap to include)
                + 2 * t * _LANE * 4)     # double-buffered ids tiles (lane-padded)

    tb = _MAX_BLOCK_IDS
    while tb > _MIN_BLOCK_IDS and per_step(tb) > _PER_STEP_BUDGET:
        tb //= 2

    # Don't pad tiny batches up to tb: bucket to powers of two >= 8
    # (block_ids is a static arg, so the bucket set bounds recompiles).
    tb = max(_MIN_BLOCK_IDS, min(tb, _next_pow2(max(n_valid, 1))))
    n_pad = _round_up(max(n_valid, 1), tb)

    ids_padded = jnp.full((n_pad, 1), padding_idx, dtype=jnp.int32)
    ids_padded = ids_padded.at[:n_valid, 0].set(ids.astype(jnp.int32))

    out_padded = _embedding_gather_padded(
        emb_table_padded, ids_padded, block_ids=tb, vocab_block=vocab_block)
    return out_padded[:n_valid, :emb_size]


# ---------------------------------------------------------------------------
# JAX-side module mirroring the PyTorch Embedding wrapper (glue only)
# ---------------------------------------------------------------------------
class Embedding:
    """JAX/Pallas port of the PyTorch `Embedding` lookup module (forward only)."""

    def __init__(self, alphabet: set, emb_size: int, key: jax.Array):
        self.emb_size = emb_size
        self.obj_to_ix = {}
        for ix, obj in enumerate(sorted(alphabet)):   # deterministic order
            self.obj_to_ix[obj] = ix
        self.padding_idx = len(self.obj_to_ix)
        vocab = len(self.obj_to_ix) + 1

        # nn.Embedding default init: N(0, 1); padding_idx row is zeroed.
        table = jax.random.normal(key, (vocab, emb_size), dtype=jnp.float32)
        table = table.at[self.padding_idx].set(0.0)
        self.emb_table = table                         # unpadded (reference)

        # Padded copy used by the kernel (MXU/layout friendly: 128-aligned).
        v_pad = _round_up(vocab, 128)
        e_pad = _round_up(emb_size, 128)
        padded = jnp.zeros((v_pad, e_pad), dtype=jnp.float32)
        self._table_padded = padded.at[:vocab, :emb_size].set(table)

    def embedding_size(self) -> int:
        return self.emb_size

    def _to_ids(self, syms: Iterable) -> jnp.ndarray:
        ixs = [self.obj_to_ix.get(sym, self.padding_idx) for sym in syms]
        return jnp.asarray(ixs, dtype=jnp.int32)

    def forward(self, sym) -> jnp.ndarray:
        """Embed a single symbol -> [emb_size]."""
        return self.forwards([sym])[0]

    def forwards(self, syms: Iterable) -> jnp.ndarray:
        """Embed a sequence of symbols -> [N, emb_size]."""
        syms = list(syms)
        ids = self._to_ids(syms)
        return embedding_forwards_pallas(
            self._table_padded, ids, len(syms), self.emb_size, self.padding_idx)


# ---------------------------------------------------------------------------
# Demo / smoke test
# ---------------------------------------------------------------------------
if __name__ == "__main__":
    key = jax.random.PRNGKey(0)
    k_emb, k_tbl, k_ids = jax.random.split(key, 3)

    # --- Test 1: resident-table path via the Embedding module -------------
    alphabet = set("abcdefgh")          # 8 symbols -> vocab = 9 (with padding)
    emb_size = 128                      # lane-dense embedding width
    emb = Embedding(alphabet, emb_size, k_emb)

    syms = ["a", "b", "a", "c", "?", "h", "d", "z"]   # '?' / 'z' -> padding_idx
    out = jax.block_until_ready(emb.forwards(syms))

    ids_ref = emb._to_ids(syms)
    ref = jnp.take(emb.emb_table, ids_ref, axis=0)
    assert out.shape == (len(syms), emb_size)
    assert out.dtype == jnp.float32
    assert jnp.allclose(out, ref), "Pallas resident gather mismatch vs reference"
    assert jnp.allclose(out[4], 0.0) and jnp.allclose(out[7], 0.0)

    single = jax.block_until_ready(emb.forward("a"))
    assert single.shape == (emb_size,)
    assert jnp.allclose(single, out[0])

    # --- Test 2: vocab-blocked (streaming + accumulate) path ----------------
    v_pad2, e_pad2 = 256, 128
    table2 = jax.random.normal(k_tbl, (v_pad2, e_pad2), dtype=jnp.float32)
    ids2 = jax.random.randint(k_ids, (16,), 0, v_pad2, dtype=jnp.int32)
    ids2_padded = ids2.reshape(16, 1)
    out2 = _embedding_gather_padded(table2, ids2_padded,
                                    block_ids=16, vocab_block=128)
    out2 = jax.block_until_ready(out2)
    ref2 = jnp.take(table2, ids2, axis=0)
    assert out2.shape == (16, e_pad2)
    assert jnp.allclose(out2, ref2), "Pallas vocab-blocked gather mismatch"

    print("KERNEL_OK")
</pallas_src>

<mosaic_0001>
module attributes {stable_mosaic.version = 11 : i64} {
  func.func @_gather_resident_kernel(%arg0: i32, %arg1: memref<8x1xi32, #tpu.memory_space<vmem>>, %arg2: memref<128x128xf32, #tpu.memory_space<vmem>>, %arg3: memref<8x128xf32, #tpu.memory_space<vmem>>) attributes {dimension_semantics = [#tpu.dimension_semantics<parallel>], iteration_bounds = array<i64: 1>, scalar_prefetch = 0 : i64, scratch_operands = 0 : i64, tpu.core_type = #tpu.core_type<tc>, window_params = [{transform_indices = @transform_0, window_bounds = array<i64: 8, 1>}, {pipeline_mode = #tpu.pipeline_mode<synchronous>, transform_indices = @transform_1, window_bounds = array<i64: 128, 128>}, {transform_indices = @transform_2, window_bounds = array<i64: 8, 128>}]} {
    %c0 = arith.constant 0 : index
    %c0_0 = arith.constant 0 : index
    %0 = vector.load %arg1[%c0, %c0_0] : memref<8x1xi32, #tpu.memory_space<vmem>>, vector<8x1xi32>
    %1 = tpu.iota {dimensions = array<i32: 1>} : vector<8x128xi32>
    %2 = vector.broadcast %0 : vector<8x1xi32> to vector<8x128xi32>
    %3 = arith.cmpi eq, %1, %2 : vector<8x128xi32>
    %4 = arith.extui %3 : vector<8x128xi1> to vector<8x128xi32>
    %5 = arith.sitofp %4 : vector<8x128xi32> to vector<8x128xf32>
    %c0_1 = arith.constant 0 : index
    %c0_2 = arith.constant 0 : index
    %6 = vector.load %arg2[%c0_1, %c0_2] : memref<128x128xf32, #tpu.memory_space<vmem>>, vector<128x128xf32>
    %cst = arith.constant dense<0.000000e+00> : vector<8x128xf32>
    %7 = tpu.matmul %5, %6, %cst {dimension_numbers = #tpu.dot_dimension_numbers<[1], [0], [0], [1], [0, 0, 1, 1], [], []>} : vector<8x128xf32>, vector<128x128xf32>, vector<8x128xf32> -> vector<8x128xf32>
    %c0_3 = arith.constant 0 : index
    %c0_4 = arith.constant 0 : index
    %8 = vector.load %arg3[%c0_3, %c0_4] : memref<8x128xf32, #tpu.memory_space<vmem>>, vector<8x128xf32>
    tpu.vector_store %arg3[%c0_3, %c0_4], %7 {strides = array<i32>} : memref<8x128xf32, #tpu.memory_space<vmem>>, vector<8x128xf32>,
    return
  }
  func.func @transform_0(%arg0: i32) -> (i32, i32) {
    %c0_i32 = arith.constant 0 : i32
    %c0_i32_0 = arith.constant 0 : i32
    return %arg0, %c0_i32 : i32, i32
  }
  func.func @transform_1(%arg0: i32) -> (i32, i32) {
    %c0_i32 = arith.constant 0 : i32
    %c0_i32_0 = arith.constant 0 : i32
    %c0_i32_1 = arith.constant 0 : i32
    return %c0_i32, %c0_i32_0 : i32, i32
  }
  func.func @transform_2(%arg0: i32) -> (i32, i32) {
    %c0_i32 = arith.constant 0 : i32
    %c0_i32_0 = arith.constant 0 : i32
    return %arg0, %c0_i32 : i32, i32
  }
}

</mosaic_0001>

<llo_original>
// kernel: _embedding_gather_padded.1
$region0: #{_embedding_gather_padded.1}
  #allocation0 [shape = 'u32[]', space=smem, size = 0x4, offset = 0x4, fixed_abs, tag = 'smem constant byte address 0x4 - core index']
  #allocation1 [shape = 'u32[144,128]{1,0:T(1,128)}', space=vmem, size = 0x12000, scoped, tag = 'internal scratch']
  %s0 = inlined_call_operand.vmem [shape: s32[8,1], index: 0, kind: input, shape index: {}]
  %s1 = inlined_call_operand.hbm [shape: f32[128,128], index: 1, kind: input, shape index: {}]
  %s2 = inlined_call_operand.hbm [shape: f32[8,128], index: 2, kind: output, shape index: {}]
  %s3 = sld [smem:[#allocation0]]
  $region22: #{_embedding_gather_padded.1} parent=0
    _
  %s5 = ssub.s32 1, %s3
  %s6 = scalar_select 0, %s5, %s3
  $region1: #{_embedding_gather_padded.1} parent=0
    #allocation2 [shape = 'u8[65536]{0}', space=vmem, size = 0x10000, scoped, tag = 'input window, operand 1, single buffered']
    #allocation3 [shape = 's32[1]{0}', space=sflag, size = 0x4, scoped, tag = 'scoped memory for _embedding_gather_padded.1']
    #allocation4 [shape = 's32[1]{0}', space=sflag, size = 0x4, scoped, tag = 'scoped memory for _embedding_gather_padded.1']
    #allocation5 [shape = 'u8[4096]{0}', space=vmem, size = 0x1000, scoped, tag = 'output window, operand 0, single buffered']
    %7 = vsyncpa [#allocation3], 0
    %8 = vsyncpa [#allocation4], 0
    // Predicated region
    $region2: #{_embedding_gather_padded.1} parent=1 // pred_check
      _
    $region3: #{_embedding_gather_padded.1} parent=1 // pred_check_branch
      %10 = sbr.rel (0) target = $region5
    $region4: #{_embedding_gather_padded.1} parent=1 // pred_region
      _
    $region5: #{_embedding_gather_padded.1} parent=1 // pred_fallthru
      _
    // Predicated region
    $region6: #{_embedding_gather_padded.1} parent=1 // pred_check
      _
    $region7: #{_embedding_gather_padded.1} parent=1 // pred_check_branch
      %12 = sbr.rel (0) target = $region9
    $region8: #{_embedding_gather_padded.1} parent=1 // pred_region
      %s14 = ssub.s32 2048, 2048
      %15 = vsyncadd [#allocation3], %s14
      %s16 = sshll.u32 [#allocation2], 4
      %s17 = int_to_ptr.vmem [resolvable:$true] %s16
      %22 = dma.hbm_to_vmem [thread:$0]  %s1, 2048, %s17, [#allocation3], 128, 128, 8
    $region9: #{_embedding_gather_padded.1} parent=1 // pred_fallthru
      _
    // Predicated region
    $region10: #{_embedding_gather_padded.1} parent=1 // pred_check
      _
    $region11: #{_embedding_gather_padded.1} parent=1 // pred_check_branch
      %24 = sbr.rel (0) target = $region13
    $region12: #{_embedding_gather_padded.1} parent=1 // pred_region
      %25 = dma.done [#allocation3], 2048
    $region13: #{_embedding_gather_padded.1} parent=1 // pred_fallthru
      _
    %v26 = vld [vmem:[%s0] sm:$0xff]
    %v27 = vlaneseq
    %v28 = vand.u32 %v27, 127
    %29 = vset.pattern.permute.xlu0 0
    %30 = vperm.xlu0 %29, %v26
    %v31 = vpop.permute.xlu0 %30
    %vm32 = vcmp.eq.s32.totalorder %v28, %v31
    %v33 = vsel %vm32, 1, 0
    %v34 = vcvt.s32.f32 %v33
    %v35 = vld [vmem:[#allocation2] sm:$0xff]
    %v36 = vld [vmem:[#allocation2 + $0x8] sm:$0xff]
    %v37 = vld [vmem:[#allocation2 + $0x10] sm:$0xff]
    %v38 = vld [vmem:[#allocation2 + $0x18] sm:$0xff]
    %v39 = vld [vmem:[#allocation2 + $0x20] sm:$0xff]
    %v40 = vld [vmem:[#allocation2 + $0x28] sm:$0xff]
    %v41 = vld [vmem:[#allocation2 + $0x30] sm:$0xff]
    %v42 = vld [vmem:[#allocation2 + $0x38] sm:$0xff]
    %v43 = vld [vmem:[#allocation2 + $0x40] sm:$0xff]
    %v44 = vld [vmem:[#allocation2 + $0x48] sm:$0xff]
    %v45 = vld [vmem:[#allocation2 + $0x50] sm:$0xff]
    %v46 = vld [vmem:[#allocation2 + $0x58] sm:$0xff]
    %v47 = vld [vmem:[#allocation2 + $0x60] sm:$0xff]
    %v48 = vld [vmem:[#allocation2 + $0x68] sm:$0xff]
    %v49 = vld [vmem:[#allocation2 + $0x70] sm:$0xff]
    %v50 = vld [vmem:[#allocation2 + $0x78] sm:$0xff]
    %51 = vmatprep.subr.mxu0 0.0
    %52 = vmatpush1.msra.mxu0 %v35
    %53 = vmatprep.subr.mxu0 0.0
    %54 = vmatpush1.msra.mxu0 %v36
    %55 = vmatprep.subr.mxu0 0.0
    %56 = vmatpush1.msra.mxu0 %v37
    %57 = vmatprep.subr.mxu0 0.0
    %58 = vmatpush1.msra.mxu0 %v38
    %59 = vmatprep.subr.mxu0 0.0
    %60 = vmatpush1.msra.mxu0 %v39
    %61 = vmatprep.subr.mxu0 0.0
    %62 = vmatpush1.msra.mxu0 %v40
    %63 = vmatprep.subr.mxu0 0.0
    %64 = vmatpush1.msra.mxu0 %v41
    %65 = vmatprep.subr.mxu0 0.0
    %66 = vmatpush1.msra.mxu0 %v42
    %67 = vmatprep.subr.mxu0 0.0
    %68 = vmatpush1.msra.mxu0 %v43
    %69 = vmatprep.subr.mxu0 0.0
    %70 = vmatpush1.msra.mxu0 %v44
    %71 = vmatprep.subr.mxu0 0.0
    %72 = vmatpush1.msra.mxu0 %v45
    %73 = vmatprep.subr.mxu0 0.0
    %74 = vmatpush1.msra.mxu0 %v46
    %75 = vmatprep.subr.mxu0 0.0
    %76 = vmatpush1.msra.mxu0 %v47
    %77 = vmatprep.subr.mxu0 0.0
    %78 = vmatpush1.msra.mxu0 %v48
    %79 = vmatprep.subr.mxu0 0.0
    %80 = vmatpush1.msra.mxu0 %v49
    %81 = vmatprep.subr.mxu0 0.0
    %82 = vmatpush1.msra.mxu0 %v50
    %83 = vmatprep.subr.mxu0 0.0
    %84 = vmatpush1.msra.mxu0 0.0
    %85 = vmatprep.subr.mxu0 0.0
    %86 = vmatpush1.msra.mxu0 0.0
    %87 = vmatprep.subr.mxu0 0.0
    %88 = vmatpush1.msra.mxu0 0.0
    %89 = vmatprep.subr.mxu0 0.0
    %90 = vmatpush1.msra.mxu0 0.0
    %91 = vmatprep.subr.mxu0 0.0
    %92 = vmatpush1.msra.mxu0 0.0
    %93 = vmatprep.subr.mxu0 0.0
    %94 = vmatpush1.msra.mxu0 0.0
    %95 = vmatprep.subr.mxu0 0.0
    %96 = vmatpush1.msra.mxu0 0.0
    %97 = vmatprep.subr.mxu0 0.0
    %98 = vmatpush1.msra.mxu0 0.0
    %99 = vmatprep.subr.mxu0 0.0
    %100 = vmatpush1.msra.mxu0 0.0
    %101 = vmatprep.subr.mxu0 0.0
    %102 = vmatpush1.msra.mxu0 0.0
    %103 = vmatprep.subr.mxu0 0.0
    %104 = vmatpush1.msra.mxu0 0.0
    %105 = vmatprep.subr.mxu0 0.0
    %106 = vmatpush1.msra.mxu0 0.0
    %107 = vmatprep.subr.mxu0 0.0
    %108 = vmatpush1.msra.mxu0 0.0
    %109 = vmatprep.subr.mxu0 0.0
    %110 = vmatpush1.msra.mxu0 0.0
    %111 = vmatprep.subr.mxu0 0.0
    %112 = vmatpush1.msra.mxu0 0.0
    %113 = vmatprep.subr.mxu0 0.0
    %114 = vmatpush1.msra.mxu0 0.0
    %115 = vmatprep.mubr.f32.mxu0 0.0
    %116 = vmatmul.mubr.f32.gmra.mrb[0].mxu0 %v34
    %v117 = vpop.f32.mrb[0].mxu0
    %v118 = vadd.f32 0.0, %v117
    %v119 = vpop.f32.mrb[0].mxu0
    %120 = vdwg.mxu0
    %121 = vst [vmem:[#allocation5] sm:$0xff] %v118
    // Predicated region
    $region14: #{_embedding_gather_padded.1} parent=1 // pred_check
      _
    $region15: #{_embedding_gather_padded.1} parent=1 // pred_check_branch
      %123 = sbr.rel (0) target = $region17
    $region16: #{_embedding_gather_padded.1} parent=1 // pred_region
      %s125 = ssub.s32 128, 128
      %126 = vsyncadd [#allocation4], %s125
      %s128 = sshll.u32 [#allocation5], 4
      %s129 = int_to_ptr.vmem [resolvable:$true] %s128
      %131 = dma.vmem_to_hbm [thread:$0]  %s129, 128, %s2, [#allocation4]
    $region17: #{_embedding_gather_padded.1} parent=1 // pred_fallthru
      _
    // Predicated region
    $region18: #{_embedding_gather_padded.1} parent=1 // pred_check
      _
    $region19: #{_embedding_gather_padded.1} parent=1 // pred_check_branch
      %133 = sbr.rel (0) target = $region21
    $region20: #{_embedding_gather_padded.1} parent=1 // pred_region
      %134 = dma.done [#allocation4], 128
    $region21: #{_embedding_gather_padded.1} parent=1 // pred_fallthru
      _
    %135 = vsyncpa [#allocation3], 1
    %136 = vsyncpa [#allocation4], 1

</llo_original>
